<compile_context>
chip_gen: v6e
topology: v6e:2x2x1
jax: 0.10.0
libtpu: 0.0.40
codegen_flags: <defaults>
</compile_context>

<pallas_src>
import functools

import jax
import jax.numpy as jnp
from jax.experimental import pallas as pl
from jax.experimental.pallas import tpu as pltpu


def _round_up(n, m):
    return ((n + m - 1) // m) * m


def _default_budgets():
    """Returns (bytes of x+out per grid step per buffer, vmem_limit_bytes).

    Conservative default is sized for v7x (64 MiB physical VMEM): ~8 MiB per
    step, double-buffered, stays well under a 32 MiB scoped limit.  v5e/v6e
    (128 MiB VMEM) get ~16 MiB tiles to amortize the ~0.35us per-step
    pipeline overhead further.  Unknown generations keep the safe default.
    """
    step_budget = 8 * 1024 * 1024
    vmem_limit = 32 * 1024 * 1024
    try:
        kind = jax.devices()[0].device_kind.lower()
        if any(t in kind for t in ("v5 lite", "v5e", "v6 lite", "v6e")):
            step_budget = 16 * 1024 * 1024
            vmem_limit = 64 * 1024 * 1024
    except Exception:
        pass
    return step_budget, vmem_limit


# ------------------------------------------------------------------ kernels

def _lane_dense_kernel(x_ref, u_ref, v_ref, o_ref, *, L, D, P):
    # x_ref: (tile_rows, P*D)   u_ref/v_ref: (1, P*D)   o_ref: (1, P, tile_rows)
    w = u_ref[...] ** L - v_ref[...] ** L              # (1, P*D)        VPU
    prod = x_ref[...] * w                              # (tile_rows, P*D) VPU bcast
    for p in range(P):                                 # static unroll, P = 128//D
        seg = prod[:, p * D:(p + 1) * D]               # (tile_rows, D) lane slice
        # XLU lane-reduce; the (tile_rows,) result lands lane-major on
        # sublane p of the output slab -> lane-dense, unmasked stores.
        o_ref[0, p, :] = jnp.sum(seg, axis=-1)


def _narrow_kernel(x_ref, u_ref, v_ref, o_ref, *, L, D, P):
    # Fallback layout.  o_ref: (tile_rows, P)  (lane-padded in VMEM).
    w = u_ref[...] ** L - v_ref[...] ** L
    prod = x_ref[...] * w
    cols = [jnp.sum(prod[:, p * D:(p + 1) * D], axis=-1, keepdims=True)
            for p in range(P)]
    o_ref[...] = cols[0] if P == 1 else jnp.concatenate(cols, axis=-1)


# ------------------------------------------------------------------ wrapper

def _plan_tiles(rows, lanes, P, step_budget_bytes, tile_rows_arg, lane_dense):
    """Pick tile_rows (packed rows per grid step) from a VMEM byte budget."""
    x_row_bytes = _round_up(lanes, 128) * 4            # lane-padded x row in VMEM
    out_row_bytes = (8 * 4) if lane_dense else (_round_up(P, 128) * 4)
    row_bytes = x_row_bytes + out_row_bytes
    if 8 * row_bytes > step_budget_bytes:
        # TODO(synk): for huge D add a reduction grid axis over D with an f32
        # accumulator instead of requiring a full row per block.
        raise ValueError(
            f"row width {lanes} too large for a single block under "
            f"{step_budget_bytes} bytes per grid step")
    if tile_rows_arg is None:
        tile_rows = max(8, (step_budget_bytes // row_bytes) // 8 * 8)
    else:
        tile_rows = max(8, _round_up(int(tile_rows_arg), 8))
    if tile_rows >= rows:
        tile_rows = rows                                # single full block
    return tile_rows, pl.cdiv(rows, tile_rows)


def _run(x2, u2, v2, *, L, D, P, tile_rows, num_tiles, vmem_limit_bytes,
         lane_dense):
    lanes = x2.shape[1]
    in_specs = [
        pl.BlockSpec((tile_rows, lanes), lambda i: (i, 0)),   # x tile, pipelined
        pl.BlockSpec((1, lanes), lambda i: (0, 0)),           # u, VMEM-resident
        pl.BlockSpec((1, lanes), lambda i: (0, 0)),           # v, VMEM-resident
    ]
    if lane_dense:
        kernel = functools.partial(_lane_dense_kernel, L=L, D=D, P=P)
        out_shape = jax.ShapeDtypeStruct((num_tiles, P, tile_rows), jnp.float32)
        out_specs = pl.BlockSpec((1, P, tile_rows), lambda i: (i, 0, 0))
    else:
        kernel = functools.partial(_narrow_kernel, L=L, D=D, P=P)
        out_shape = jax.ShapeDtypeStruct((num_tiles * tile_rows, P), jnp.float32)
        out_specs = pl.BlockSpec((tile_rows, P), lambda i: (i, 0))
    return pl.pallas_call(
        kernel,
        out_shape=out_shape,
        grid=(num_tiles,),
        in_specs=in_specs,
        out_specs=out_specs,
        compiler_params=pltpu.CompilerParams(
            # Row tiles are independent -> shard across TensorCores where
            # available (no-op on single-TC v5e/v6e).
            # TODO(synk): if xprof on v7x shows the grid serialized on one
            # core, switch this axis to pltpu.CORE_PARALLEL.
            dimension_semantics=("parallel",),
            vmem_limit_bytes=vmem_limit_bytes,
        ),
    )(x2, u2, v2)


_LANE_DENSE_OK = None  # cached capability probe for the lane-dense layout


def diagonal_net_forward(x, u, v, L, *, tile_rows=None,
                         step_budget_bytes=None, vmem_limit_bytes=None):
    """DiagonalNet forward: (x @ (u**L - v**L))[:, None].  x: (N, D) -> (N, 1)."""
    global _LANE_DENSE_OK
    N, D = x.shape
    L = int(L)
    x = x.astype(jnp.float32)
    u = jnp.asarray(u, jnp.float32).reshape(-1)
    v = jnp.asarray(v, jnp.float32).reshape(-1)

    budget, limit = _default_budgets()
    if step_budget_bytes is None:
        step_budget_bytes = budget
    if vmem_limit_bytes is None:
        vmem_limit_bytes = limit

    # Lane packing: fold P = 128//D rows into the lane dim when D divides 128
    # (free contiguous reshape, no HBM copy).
    P = 1
    if D < 128 and 128 % D == 0 and N >= 128 // D and N % (128 // D) == 0:
        P = 128 // D
    # TODO(synk): N % P != 0 currently falls back to the unpacked path; a
    # split main/tail call would keep packing for the bulk of the rows.
    rows, lanes = N // P, P * D
    x2 = x.reshape(rows, lanes)
    u2 = jnp.tile(u, P).reshape(1, lanes)
    v2 = jnp.tile(v, P).reshape(1, lanes)

    common = dict(L=L, D=D, P=P, vmem_limit_bytes=vmem_limit_bytes)

    if _LANE_DENSE_OK is not False:
        try:
            tr, nt = _plan_tiles(rows, lanes, P, step_budget_bytes, tile_rows,
                                 lane_dense=True)
            out = _run(x2, u2, v2, tile_rows=tr, num_tiles=nt,
                       lane_dense=True, **common)
            out = jax.block_until_ready(out)
            _LANE_DENSE_OK = True
            # out[i, p, r] = sum of logical row (i*tile_rows + r)*P + p.
            if P > 1:
                out = jnp.transpose(out, (0, 2, 1))   # ~N floats: layout plumbing
            return out.reshape(-1)[:N].reshape(N, 1)
        except Exception:
            # Portability fallback (older Mosaic relayout support for 1-D
            # reduce results); recompute the tile plan since the narrow
            # output block is lane-padded in VMEM.
            _LANE_DENSE_OK = False

    tr, nt = _plan_tiles(rows, lanes, P, step_budget_bytes, tile_rows,
                         lane_dense=False)
    out = _run(x2, u2, v2, tile_rows=tr, num_tiles=nt,
               lane_dense=False, **common)
    # out[g, p] = sum of logical row g*P + p  -> row-major flatten is already
    # logical order.
    return out.reshape(-1)[:N].reshape(N, 1)


# --------------------------------------------------------------------- demo

if __name__ == "__main__":
    # Module hyperparameters (small, deterministic).
    alpha, L, dimD = 0.5, 3, 32
    N = 8

    key = jax.random.PRNGKey(0)
    kx, ku, kv, kx2, kx3 = jax.random.split(key, 5)

    init_val = alpha / (dimD * 2) ** 0.5

    # --- Check 1: exact DiagonalNet.__init__ parameters (u == v => w == 0). ---
    u0 = jnp.full((dimD,), init_val, dtype=jnp.float32)
    v0 = jnp.full((dimD,), init_val, dtype=jnp.float32)
    x = jax.random.normal(kx, (N, dimD), dtype=jnp.float32)
    out0 = jax.block_until_ready(diagonal_net_forward(x, u0, v0, L))
    ref0 = (x @ (u0 ** L - v0 ** L))[:, None]
    assert out0.shape == (N, 1), out0.shape
    assert jnp.allclose(out0, ref0, atol=1e-5, rtol=1e-5)

    # --- Check 2: distinct random u, v (non-vacuous forward check). ---
    u1 = init_val * (1.0 + 0.1 * jax.random.normal(ku, (dimD,), dtype=jnp.float32))
    v1 = init_val * (1.0 + 0.1 * jax.random.normal(kv, (dimD,), dtype=jnp.float32))
    out1 = jax.block_until_ready(diagonal_net_forward(x, u1, v1, L))
    ref1 = (x @ (u1 ** L - v1 ** L))[:, None]
    assert jnp.allclose(out1, ref1, atol=1e-5, rtol=1e-5)

    # --- Check 3: ragged multi-tile grid on the lane-packed (D | 128) path. ---
    N2 = 40                                    # P=4 -> 10 packed rows, tile 8
    x2 = jax.random.normal(kx2, (N2, dimD), dtype=jnp.float32)
    out2 = jax.block_until_ready(diagonal_net_forward(x2, u1, v1, L, tile_rows=8))
    ref2 = (x2 @ (u1 ** L - v1 ** L))[:, None]
    assert out2.shape == (N2, 1), out2.shape
    assert jnp.allclose(out2, ref2, atol=1e-5, rtol=1e-5)

    # --- Check 4: unpacked path (D does not divide 128), ragged grid. ---
    D3, N3 = 40, 24
    u3 = init_val * (1.0 + 0.1 * jax.random.normal(ku, (D3,), dtype=jnp.float32))
    v3 = init_val * (1.0 + 0.1 * jax.random.normal(kv, (D3,), dtype=jnp.float32))
    x3 = jax.random.normal(kx3, (N3, D3), dtype=jnp.float32)
    out3 = jax.block_until_ready(diagonal_net_forward(x3, u3, v3, L, tile_rows=16))
    ref3 = (x3 @ (u3 ** L - v3 ** L))[:, None]
    assert out3.shape == (N3, 1), out3.shape
    assert jnp.allclose(out3, ref3, atol=1e-5, rtol=1e-5)

    print("KERNEL_OK")
</pallas_src>

<mosaic_0001>
module attributes {stable_mosaic.version = 11 : i64} {
  func.func @_lane_dense_kernel(%arg0: i32, %arg1: memref<2x128xf32, #tpu.memory_space<vmem>>, %arg2: memref<1x128xf32, #tpu.memory_space<vmem>>, %arg3: memref<1x128xf32, #tpu.memory_space<vmem>>, %arg4: memref<1x4x2xf32, #tpu.memory_space<vmem>>) attributes {dimension_semantics = [#tpu.dimension_semantics<parallel>], iteration_bounds = array<i64: 1>, scalar_prefetch = 0 : i64, scratch_operands = 0 : i64, tpu.core_type = #tpu.core_type<tc>, window_params = [{transform_indices = @transform_0, window_bounds = array<i64: 2, 128>}, {pipeline_mode = #tpu.pipeline_mode<synchronous>, transform_indices = @transform_1, window_bounds = array<i64: 1, 128>}, {pipeline_mode = #tpu.pipeline_mode<synchronous>, transform_indices = @transform_2, window_bounds = array<i64: 1, 128>}, {transform_indices = @transform_3, window_bounds = array<i64: 1, 4, 2>}]} {
    %c0 = arith.constant 0 : index
    %c0_0 = arith.constant 0 : index
    %0 = vector.load %arg2[%c0, %c0_0] : memref<1x128xf32, #tpu.memory_space<vmem>>, vector<1x128xf32>
    %1 = arith.mulf %0, %0 : vector<1x128xf32>
    %2 = arith.mulf %0, %1 : vector<1x128xf32>
    %c0_1 = arith.constant 0 : index
    %c0_2 = arith.constant 0 : index
    %3 = vector.load %arg3[%c0_1, %c0_2] : memref<1x128xf32, #tpu.memory_space<vmem>>, vector<1x128xf32>
    %4 = arith.mulf %3, %3 : vector<1x128xf32>
    %5 = arith.mulf %3, %4 : vector<1x128xf32>
    %6 = arith.subf %2, %5 : vector<1x128xf32>
    %c0_3 = arith.constant 0 : index
    %c0_4 = arith.constant 0 : index
    %7 = vector.load %arg1[%c0_3, %c0_4] : memref<2x128xf32, #tpu.memory_space<vmem>>, vector<2x128xf32>
    %8 = vector.broadcast %6 : vector<1x128xf32> to vector<2x128xf32>
    %9 = arith.mulf %7, %8 : vector<2x128xf32>
    %10 = vector.extract_strided_slice %9 {offsets = [0, 0], sizes = [2, 32], strides = [1, 1]} : vector<2x128xf32> to vector<2x32xf32>
    %cst = arith.constant dense<0.000000e+00> : vector<2xf32>
    %11 = vector.multi_reduction <add>, %10, %cst [1] : vector<2x32xf32> to vector<2xf32>
    %c0_5 = arith.constant 0 : index
    %c0_6 = arith.constant 0 : index
    %c0_7 = arith.constant 0 : index
    %12 = vector.load %arg4[%c0_5, %c0_6, %c0_7] : memref<1x4x2xf32, #tpu.memory_space<vmem>>, vector<1x1x2xf32>
    %13 = vector.shape_cast %12 : vector<1x1x2xf32> to vector<2xf32>
    %14 = vector.shape_cast %11 : vector<2xf32> to vector<1x1x2xf32>
    tpu.vector_store %arg4[%c0_5, %c0_6, %c0_7], %14 {strides = array<i32>} : memref<1x4x2xf32, #tpu.memory_space<vmem>>, vector<1x1x2xf32>,
    %15 = vector.extract_strided_slice %9 {offsets = [0, 32], sizes = [2, 32], strides = [1, 1]} : vector<2x128xf32> to vector<2x32xf32>
    %cst_8 = arith.constant dense<0.000000e+00> : vector<2xf32>
    %16 = vector.multi_reduction <add>, %15, %cst_8 [1] : vector<2x32xf32> to vector<2xf32>
    %c0_9 = arith.constant 0 : index
    %c1 = arith.constant 1 : index
    %c0_10 = arith.constant 0 : index
    %17 = vector.load %arg4[%c0_9, %c1, %c0_10] : memref<1x4x2xf32, #tpu.memory_space<vmem>>, vector<1x1x2xf32>
    %18 = vector.shape_cast %17 : vector<1x1x2xf32> to vector<2xf32>
    %19 = vector.shape_cast %16 : vector<2xf32> to vector<1x1x2xf32>
    tpu.vector_store %arg4[%c0_9, %c1, %c0_10], %19 {strides = array<i32>} : memref<1x4x2xf32, #tpu.memory_space<vmem>>, vector<1x1x2xf32>,
    %20 = vector.extract_strided_slice %9 {offsets = [0, 64], sizes = [2, 32], strides = [1, 1]} : vector<2x128xf32> to vector<2x32xf32>
    %cst_11 = arith.constant dense<0.000000e+00> : vector<2xf32>
    %21 = vector.multi_reduction <add>, %20, %cst_11 [1] : vector<2x32xf32> to vector<2xf32>
    %c0_12 = arith.constant 0 : index
    %c2 = arith.constant 2 : index
    %c0_13 = arith.constant 0 : index
    %22 = vector.load %arg4[%c0_12, %c2, %c0_13] : memref<1x4x2xf32, #tpu.memory_space<vmem>>, vector<1x1x2xf32>
    %23 = vector.shape_cast %22 : vector<1x1x2xf32> to vector<2xf32>
    %24 = vector.shape_cast %21 : vector<2xf32> to vector<1x1x2xf32>
    tpu.vector_store %arg4[%c0_12, %c2, %c0_13], %24 {strides = array<i32>} : memref<1x4x2xf32, #tpu.memory_space<vmem>>, vector<1x1x2xf32>,
    %25 = vector.extract_strided_slice %9 {offsets = [0, 96], sizes = [2, 32], strides = [1, 1]} : vector<2x128xf32> to vector<2x32xf32>
    %cst_14 = arith.constant dense<0.000000e+00> : vector<2xf32>
    %26 = vector.multi_reduction <add>, %25, %cst_14 [1] : vector<2x32xf32> to vector<2xf32>
    %c0_15 = arith.constant 0 : index
    %c3 = arith.constant 3 : index
    %c0_16 = arith.constant 0 : index
    %27 = vector.load %arg4[%c0_15, %c3, %c0_16] : memref<1x4x2xf32, #tpu.memory_space<vmem>>, vector<1x1x2xf32>
    %28 = vector.shape_cast %27 : vector<1x1x2xf32> to vector<2xf32>
    %29 = vector.shape_cast %26 : vector<2xf32> to vector<1x1x2xf32>
    tpu.vector_store %arg4[%c0_15, %c3, %c0_16], %29 {strides = array<i32>} : memref<1x4x2xf32, #tpu.memory_space<vmem>>, vector<1x1x2xf32>,
    return
  }
  func.func @transform_0(%arg0: i32) -> (i32, i32) {
    %c0_i32 = arith.constant 0 : i32
    %c0_i32_0 = arith.constant 0 : i32
    return %arg0, %c0_i32 : i32, i32
  }
  func.func @transform_1(%arg0: i32) -> (i32, i32) {
    %c0_i32 = arith.constant 0 : i32
    %c0_i32_0 = arith.constant 0 : i32
    %c0_i32_1 = arith.constant 0 : i32
    return %c0_i32, %c0_i32_0 : i32, i32
  }
  func.func @transform_2(%arg0: i32) -> (i32, i32) {
    %c0_i32 = arith.constant 0 : i32
    %c0_i32_0 = arith.constant 0 : i32
    %c0_i32_1 = arith.constant 0 : i32
    return %c0_i32, %c0_i32_0 : i32, i32
  }
  func.func @transform_3(%arg0: i32) -> (i32, i32, i32) {
    %c0_i32 = arith.constant 0 : i32
    %c0_i32_0 = arith.constant 0 : i32
    %c0_i32_1 = arith.constant 0 : i32
    return %arg0, %c0_i32, %c0_i32_0 : i32, i32, i32
  }
}

module attributes {stable_mosaic.version = 11 : i64} {
  func.func @_narrow_kernel(%arg0: i32, %arg1: memref<2x128xf32, #tpu.memory_space<vmem>>, %arg2: memref<1x128xf32, #tpu.memory_space<vmem>>, %arg3: memref<1x128xf32, #tpu.memory_space<vmem>>, %arg4: memref<2x4xf32, #tpu.memory_space<vmem>>) attributes {dimension_semantics = [#tpu.dimension_semantics<parallel>], iteration_bounds = array<i64: 1>, scalar_prefetch = 0 : i64, scratch_operands = 0 : i64, tpu.core_type = #tpu.core_type<tc>, window_params = [{transform_indices = @transform_0, window_bounds = array<i64: 2, 128>}, {pipeline_mode = #tpu.pipeline_mode<synchronous>, transform_indices = @transform_1, window_bounds = array<i64: 1, 128>}, {pipeline_mode = #tpu.pipeline_mode<synchronous>, transform_indices = @transform_2, window_bounds = array<i64: 1, 128>}, {transform_indices = @transform_3, window_bounds = array<i64: 2, 4>}]} {
    %c0 = arith.constant 0 : index
    %c0_0 = arith.constant 0 : index
    %0 = vector.load %arg2[%c0, %c0_0] : memref<1x128xf32, #tpu.memory_space<vmem>>, vector<1x128xf32>
    %1 = arith.mulf %0, %0 : vector<1x128xf32>
    %2 = arith.mulf %0, %1 : vector<1x128xf32>
    %c0_1 = arith.constant 0 : index
    %c0_2 = arith.constant 0 : index
    %3 = vector.load %arg3[%c0_1, %c0_2] : memref<1x128xf32, #tpu.memory_space<vmem>>, vector<1x128xf32>
    %4 = arith.mulf %3, %3 : vector<1x128xf32>
    %5 = arith.mulf %3, %4 : vector<1x128xf32>
    %6 = arith.subf %2, %5 : vector<1x128xf32>
    %c0_3 = arith.constant 0 : index
    %c0_4 = arith.constant 0 : index
    %7 = vector.load %arg1[%c0_3, %c0_4] : memref<2x128xf32, #tpu.memory_space<vmem>>, vector<2x128xf32>
    %8 = vector.broadcast %6 : vector<1x128xf32> to vector<2x128xf32>
    %9 = arith.mulf %7, %8 : vector<2x128xf32>
    %10 = vector.extract_strided_slice %9 {offsets = [0, 0], sizes = [2, 32], strides = [1, 1]} : vector<2x128xf32> to vector<2x32xf32>
    %cst = arith.constant dense<0.000000e+00> : vector<2xf32>
    %11 = vector.multi_reduction <add>, %10, %cst [1] : vector<2x32xf32> to vector<2xf32>
    %12 = vector.shape_cast %11 : vector<2xf32> to vector<2x1xf32>
    %13 = vector.extract_strided_slice %9 {offsets = [0, 32], sizes = [2, 32], strides = [1, 1]} : vector<2x128xf32> to vector<2x32xf32>
    %cst_5 = arith.constant dense<0.000000e+00> : vector<2xf32>
    %14 = vector.multi_reduction <add>, %13, %cst_5 [1] : vector<2x32xf32> to vector<2xf32>
    %15 = vector.shape_cast %14 : vector<2xf32> to vector<2x1xf32>
    %16 = vector.extract_strided_slice %9 {offsets = [0, 64], sizes = [2, 32], strides = [1, 1]} : vector<2x128xf32> to vector<2x32xf32>
    %cst_6 = arith.constant dense<0.000000e+00> : vector<2xf32>
    %17 = vector.multi_reduction <add>, %16, %cst_6 [1] : vector<2x32xf32> to vector<2xf32>
    %18 = vector.shape_cast %17 : vector<2xf32> to vector<2x1xf32>
    %19 = vector.extract_strided_slice %9 {offsets = [0, 96], sizes = [2, 32], strides = [1, 1]} : vector<2x128xf32> to vector<2x32xf32>
    %cst_7 = arith.constant dense<0.000000e+00> : vector<2xf32>
    %20 = vector.multi_reduction <add>, %19, %cst_7 [1] : vector<2x32xf32> to vector<2xf32>
    %21 = vector.shape_cast %20 : vector<2xf32> to vector<2x1xf32>
    %22 = tpu.concatenate %12, %15, %18, %21 in 1 : vector<2x1xf32>, vector<2x1xf32>, vector<2x1xf32>, vector<2x1xf32> -> vector<2x4xf32>
    %c0_8 = arith.constant 0 : index
    %c0_9 = arith.constant 0 : index
    %23 = vector.load %arg4[%c0_8, %c0_9] : memref<2x4xf32, #tpu.memory_space<vmem>>, vector<2x4xf32>
    tpu.vector_store %arg4[%c0_8, %c0_9], %22 {strides = array<i32>} : memref<2x4xf32, #tpu.memory_space<vmem>>, vector<2x4xf32>,
    return
  }
  func.func @transform_0(%arg0: i32) -> (i32, i32) {
    %c0_i32 = arith.constant 0 : i32
    %c0_i32_0 = arith.constant 0 : i32
    return %arg0, %c0_i32 : i32, i32
  }
  func.func @transform_1(%arg0: i32) -> (i32, i32) {
    %c0_i32 = arith.constant 0 : i32
    %c0_i32_0 = arith.constant 0 : i32
    %c0_i32_1 = arith.constant 0 : i32
    return %c0_i32, %c0_i32_0 : i32, i32
  }
  func.func @transform_2(%arg0: i32) -> (i32, i32) {
    %c0_i32 = arith.constant 0 : i32
    %c0_i32_0 = arith.constant 0 : i32
    %c0_i32_1 = arith.constant 0 : i32
    return %c0_i32, %c0_i32_0 : i32, i32
  }
  func.func @transform_3(%arg0: i32) -> (i32, i32) {
    %c0_i32 = arith.constant 0 : i32
    %c0_i32_0 = arith.constant 0 : i32
    return %arg0, %c0_i32 : i32, i32
  }
}

</mosaic_0001>

<llo_original>
// kernel: tpu_custom_call.1
$region0: #{tpu_custom_call.1}
  #allocation0 [shape = 'u32[]', space=smem, size = 0x4, offset = 0x4, fixed_abs, tag = 'smem constant byte address 0x4 - core index']
  #allocation1 [shape = 'u32[144,128]{1,0:T(1,128)}', space=vmem, size = 0x12000, scoped, tag = 'internal scratch']
  %s0 = inlined_call_operand.hbm [shape: f32[2,128], index: 0, kind: input, shape index: {}]
  %s1 = inlined_call_operand.vmem [shape: f32[1,128], index: 1, kind: input, shape index: {}]
  %s2 = inlined_call_operand.vmem [shape: f32[1,128], index: 2, kind: input, shape index: {}]
  %s3 = inlined_call_operand.vmem [shape: f32[1,4,2], index: 3, kind: output, shape index: {}]
  %s4 = sld [smem:[#allocation0]]
  $region26: #{tpu_custom_call.1} parent=0
    _
  %s6 = ssub.s32 1, %s4
  %s7 = scalar_select 0, %s6, %s4
  $region1: #{tpu_custom_call.1} parent=0
    #allocation2 [shape = 'u8[1024]{0}', space=vmem, size = 0x400, scoped, tag = 'input window, operand 0, single buffered']
    #allocation3 [shape = 's32[1]{0}', space=sflag, size = 0x4, scoped, tag = 'scoped memory for tpu_custom_call.1']
    %8 = vsyncpa [#allocation3], 0
    // Predicated region
    $region2: #{tpu_custom_call.1} parent=1 // pred_check
      _
    $region3: #{tpu_custom_call.1} parent=1 // pred_check_branch
      %10 = sbr.rel (0) target = $region5
    $region4: #{tpu_custom_call.1} parent=1 // pred_region
      %s12 = ssub.s32 32, 32
      %13 = vsyncadd [#allocation3], %s12
      %s15 = sshll.u32 [#allocation2], 4
      %s16 = int_to_ptr.vmem [resolvable:$true] %s15
      %18 = dma.hbm_to_vmem [thread:$0]  %s0, 32, %s16, [#allocation3]
    $region5: #{tpu_custom_call.1} parent=1 // pred_fallthru
      _
    // Predicated region
    $region6: #{tpu_custom_call.1} parent=1 // pred_check
      _
    $region7: #{tpu_custom_call.1} parent=1 // pred_check_branch
      %20 = sbr.rel (0) target = $region9
    $region8: #{tpu_custom_call.1} parent=1 // pred_region
      _
    $region9: #{tpu_custom_call.1} parent=1 // pred_fallthru
      _
    // Predicated region
    $region10: #{tpu_custom_call.1} parent=1 // pred_check
      _
    $region11: #{tpu_custom_call.1} parent=1 // pred_check_branch
      %22 = sbr.rel (0) target = $region13
    $region12: #{tpu_custom_call.1} parent=1 // pred_region
      _
    $region13: #{tpu_custom_call.1} parent=1 // pred_fallthru
      _
    // Predicated region
    $region14: #{tpu_custom_call.1} parent=1 // pred_check
      _
    $region15: #{tpu_custom_call.1} parent=1 // pred_check_branch
      %24 = sbr.rel (0) target = $region17
    $region16: #{tpu_custom_call.1} parent=1 // pred_region
      %25 = dma.done [#allocation3], 32
    $region17: #{tpu_custom_call.1} parent=1 // pred_fallthru
      _
    %v26 = vld [vmem:[%s1] sm:$0x1]
    %v27 = vmul.f32 %v26, %v26
    %v28 = vmul.f32 %v26, %v27
    %v29 = vld [vmem:[%s2] sm:$0x1]
    %v30 = vmul.f32 %v29, %v29
    %v31 = vmul.f32 %v29, %v30
    %v32 = vsub.f32 %v28, %v31
    %v33 = vld [vmem:[#allocation2] sm:$0x3]
    %v35 = vlaneseq
    %v36 = vshrl.u32 %v35, 7
    %v37 = vsub.s32 0, %v36
    %v38 = vrot.slane %v32, %v37
    %v40 = vmul.f32 %v33, %v38
    %vm41 = vcmask 254976
    %v42 = vsel %vm41, %v40, 0.0
    %43 = vadd.xlane.f32.xlu0 %v42
    %v44 = vpop.xlane.xlu0 %43
    %v46 = vlaneseq
    %v47 = vand.u32 %v46, 127
    %v48 = vlaneseq
    %v49 = vshrl.u32 %v48, 7
    %v50 = vsub.s32 %v47, %v49
    %v51 = vrot.slane %v44, %v50
    %vm53 = vcmask 8192
    %54 = vst.msk [vmem:[%s3] sm:$0x1] %vm53, %v51
    %56 = vrot.lane.b32.xlu0 %v40, 96
    %v57 = vpop.permute.xlu0 %56
    %v59 = vsel %vm41, %v57, 0.0
    %60 = vadd.xlane.f32.xlu0 %v59
    %v61 = vpop.xlane.xlu0 %60
    %v63 = vlaneseq
    %v64 = vshrl.u32 %v63, 7
    %v65 = vsub.s32 %v47, %v64
    %v66 = vrot.slane %v61, %v65
    %68 = vst.msk [vmem:[%s3 + $0x1] sm:$0x1] %vm53, %v66
    %69 = vrot.lane.b32.xlu0 %v40, 64
    %v70 = vpop.permute.xlu0 %69
    %v72 = vsel %vm41, %v70, 0.0
    %73 = vadd.xlane.f32.xlu0 %v72
    %v74 = vpop.xlane.xlu0 %73
    %v76 = vlaneseq
    %v77 = vshrl.u32 %v76, 7
    %v78 = vsub.s32 %v47, %v77
    %v79 = vrot.slane %v74, %v78
    %81 = vst.msk [vmem:[%s3 + $0x2] sm:$0x1] %vm53, %v79
    %82 = vrot.lane.b32.xlu0 %v40, 32
    %v83 = vpop.permute.xlu0 %82
    %v85 = vsel %vm41, %v83, 0.0
    %86 = vadd.xlane.f32.xlu0 %v85
    %v87 = vpop.xlane.xlu0 %86
    %v89 = vlaneseq
    %v90 = vshrl.u32 %v89, 7
    %v91 = vsub.s32 %v47, %v90
    %v92 = vrot.slane %v87, %v91
    %94 = vst.msk [vmem:[%s3 + $0x3] sm:$0x1] %vm53, %v92
    // Predicated region
    $region18: #{tpu_custom_call.1} parent=1 // pred_check
      _
    $region19: #{tpu_custom_call.1} parent=1 // pred_check_branch
      %96 = sbr.rel (0) target = $region21
    $region20: #{tpu_custom_call.1} parent=1 // pred_region
      _
    $region21: #{tpu_custom_call.1} parent=1 // pred_fallthru
      _
    // Predicated region
    $region22: #{tpu_custom_call.1} parent=1 // pred_check
      _
    $region23: #{tpu_custom_call.1} parent=1 // pred_check_branch
      %98 = sbr.rel (0) target = $region25
    $region24: #{tpu_custom_call.1} parent=1 // pred_region
      _
    $region25: #{tpu_custom_call.1} parent=1 // pred_fallthru
      _
    %99 = vsyncpa [#allocation3], 1

// kernel: tpu_custom_call.1
$region0: #{tpu_custom_call.1}
  #allocation0 [shape = 'u32[]', space=smem, size = 0x4, offset = 0x4, fixed_abs, tag = 'smem constant byte address 0x4 - core index']
  #allocation1 [shape = 'u32[144,128]{1,0:T(1,128)}', space=vmem, size = 0x12000, scoped, tag = 'internal scratch']
  %s0 = inlined_call_operand.hbm [shape: f32[2,128], index: 0, kind: input, shape index: {}]
  %s1 = inlined_call_operand.vmem [shape: f32[1,128], index: 1, kind: input, shape index: {}]
  %s2 = inlined_call_operand.vmem [shape: f32[1,128], index: 2, kind: input, shape index: {}]
  %s3 = inlined_call_operand.hbm [shape: f32[2,4], index: 3, kind: output, shape index: {}]
  %s4 = sld [smem:[#allocation0]]
  $region26: #{tpu_custom_call.1} parent=0
    _
  %s6 = ssub.s32 1, %s4
  %s7 = scalar_select 0, %s6, %s4
  $region1: #{tpu_custom_call.1} parent=0
    #allocation2 [shape = 'u8[1024]{0}', space=vmem, size = 0x400, scoped, tag = 'input window, operand 0, single buffered']
    #allocation3 [shape = 's32[1]{0}', space=sflag, size = 0x4, scoped, tag = 'scoped memory for tpu_custom_call.1']
    #allocation4 [shape = 's32[1]{0}', space=sflag, size = 0x4, scoped, tag = 'scoped memory for tpu_custom_call.1']
    #allocation5 [shape = 'u8[1024]{0}', space=vmem, size = 0x400, scoped, tag = 'output window, operand 0, single buffered']
    %8 = vsyncpa [#allocation3], 0
    %9 = vsyncpa [#allocation4], 0
    // Predicated region
    $region2: #{tpu_custom_call.1} parent=1 // pred_check
      _
    $region3: #{tpu_custom_call.1} parent=1 // pred_check_branch
      %11 = sbr.rel (0) target = $region5
    $region4: #{tpu_custom_call.1} parent=1 // pred_region
      %s13 = ssub.s32 32, 32
      %14 = vsyncadd [#allocation3], %s13
      %s16 = sshll.u32 [#allocation2], 4
      %s17 = int_to_ptr.vmem [resolvable:$true] %s16
      %19 = dma.hbm_to_vmem [thread:$0]  %s0, 32, %s17, [#allocation3]
    $region5: #{tpu_custom_call.1} parent=1 // pred_fallthru
      _
    // Predicated region
    $region6: #{tpu_custom_call.1} parent=1 // pred_check
      _
    $region7: #{tpu_custom_call.1} parent=1 // pred_check_branch
      %21 = sbr.rel (0) target = $region9
    $region8: #{tpu_custom_call.1} parent=1 // pred_region
      _
    $region9: #{tpu_custom_call.1} parent=1 // pred_fallthru
      _
    // Predicated region
    $region10: #{tpu_custom_call.1} parent=1 // pred_check
      _
    $region11: #{tpu_custom_call.1} parent=1 // pred_check_branch
      %23 = sbr.rel (0) target = $region13
    $region12: #{tpu_custom_call.1} parent=1 // pred_region
      _
    $region13: #{tpu_custom_call.1} parent=1 // pred_fallthru
      _
    // Predicated region
    $region14: #{tpu_custom_call.1} parent=1 // pred_check
      _
    $region15: #{tpu_custom_call.1} parent=1 // pred_check_branch
      %25 = sbr.rel (0) target = $region17
    $region16: #{tpu_custom_call.1} parent=1 // pred_region
      %26 = dma.done [#allocation3], 32
    $region17: #{tpu_custom_call.1} parent=1 // pred_fallthru
      _
    %v27 = vld [vmem:[%s1] sm:$0x1]
    %v28 = vmul.f32 %v27, %v27
    %v29 = vmul.f32 %v27, %v28
    %v30 = vld [vmem:[%s2] sm:$0x1]
    %v31 = vmul.f32 %v30, %v30
    %v32 = vmul.f32 %v30, %v31
    %v33 = vsub.f32 %v29, %v32
    %v34 = vld [vmem:[#allocation2] sm:$0x3]
    %v36 = vlaneseq
    %v37 = vshrl.u32 %v36, 7
    %v38 = vsub.s32 0, %v37
    %v39 = vrot.slane %v33, %v38
    %v41 = vmul.f32 %v34, %v39
    %vm42 = vcmask 254976
    %v43 = vsel %vm42, %v41, 0.0
    %44 = vadd.xlane.f32.xlu0 %v43
    %v45 = vpop.xlane.xlu0 %44
    %47 = vrot.lane.b32.xlu0 %v41, 96
    %v48 = vpop.permute.xlu0 %47
    %v50 = vsel %vm42, %v48, 0.0
    %51 = vadd.xlane.f32.xlu0 %v50
    %v52 = vpop.xlane.xlu0 %51
    %53 = vrot.lane.b32.xlu0 %v41, 64
    %v54 = vpop.permute.xlu0 %53
    %v56 = vsel %vm42, %v54, 0.0
    %57 = vadd.xlane.f32.xlu0 %v56
    %v58 = vpop.xlane.xlu0 %57
    %59 = vrot.lane.b32.xlu0 %v41, 32
    %v60 = vpop.permute.xlu0 %59
    %v62 = vsel %vm42, %v60, 0.0
    %63 = vadd.xlane.f32.xlu0 %v62
    %v64 = vpop.xlane.xlu0 %63
    %vm65 = vcmask 7168
    %v66 = vsel %vm65, %v45, %v52
    %vm67 = vcmask 15360
    %v68 = vsel %vm67, %v66, %v58
    %vm69 = vcmask 23552
    %v70 = vsel %vm69, %v68, %v64
    %vm71 = vcmask 25600
    %72 = vst.msk [vmem:[#allocation5] sm:$0x3] %vm71, %v70
    // Predicated region
    $region18: #{tpu_custom_call.1} parent=1 // pred_check
      _
    $region19: #{tpu_custom_call.1} parent=1 // pred_check_branch
      %74 = sbr.rel (0) target = $region21
    $region20: #{tpu_custom_call.1} parent=1 // pred_region
      %s76 = ssub.s32 32, 32
      %77 = vsyncadd [#allocation4], %s76
      %s79 = sshll.u32 [#allocation5], 4
      %s80 = int_to_ptr.vmem [resolvable:$true] %s79
      %82 = dma.vmem_to_hbm [thread:$0]  %s80, 32, %s3, [#allocation4]
    $region21: #{tpu_custom_call.1} parent=1 // pred_fallthru
      _
    // Predicated region
    $region22: #{tpu_custom_call.1} parent=1 // pred_check
      _
    $region23: #{tpu_custom_call.1} parent=1 // pred_check_branch
      %84 = sbr.rel (0) target = $region25
    $region24: #{tpu_custom_call.1} parent=1 // pred_region
      %85 = dma.done [#allocation4], 32
    $region25: #{tpu_custom_call.1} parent=1 // pred_fallthru
      _
    %86 = vsyncpa [#allocation3], 1
    %87 = vsyncpa [#allocation4], 1

</llo_original>
